<compile_context>
chip_gen: v7x
topology: tpu7x:2x2x1
jax: 0.10.0
libtpu: 0.0.40
codegen_flags: <defaults>
</compile_context>

<pallas_src>
import functools

import numpy as np
import jax
import jax.numpy as jnp
from jax.experimental import pallas as pl
from jax.experimental.pallas import tpu as pltpu


def _ceil_to(x, n):
    return ((x + n - 1) // n) * n


def _device_vmem_bytes():
    try:
        return int(pltpu.get_tpu_info().vmem_capacity_bytes)
    except Exception:
        return 64 * 1024 * 1024  # conservative fallback (v7x per-core VMEM)


# ---------------------------------------------------------------------------
# Kernel 1: fused forward VFT (reduction over point tiles) + spectral mixing.
#   x_ref:     (n_in_loc, p_tile)   bf16  point tile of the input fields
#   vfwd_ref:  (p_tile, L)          bf16  stacked [Vim_top|Vim_bot|Vre_top|Vre_bot]^T
#   wbig2_ref: (ci, co, 2L)         f32   sign-folded weights, [head | channel-flipped head]
#   z_ref:     (n_out_loc, 2L)      f32   [head_re|head_im | head_re(flip)|head_im(flip)]
#   acc_ref:   (n_in_loc, L)        f32   VMEM-resident spectrum accumulator
# grid = (nb batch groups ['parallel'], n_p point tiles ['arbitrary' reduction])
# ---------------------------------------------------------------------------
def _fwd_mix_kernel(x_ref, vfwd_ref, wbig2_ref, z_ref, acc_ref, *, b_loc, ci, co, mm):
    k = pl.program_id(1)

    @pl.when(k == 0)
    def _init():
        acc_ref[...] = jnp.zeros_like(acc_ref)

    # forward transform: acc += x_tile @ V_tile   (bf16 in, f32 accumulate)
    acc_ref[...] += jnp.dot(x_ref[...], vfwd_ref[...],
                            preferred_element_type=jnp.float32)

    @pl.when(k == pl.num_programs(1) - 1)
    def _mix():
        L = 4 * mm
        # (b_loc*ci, L) -> (b_loc, ci, 1, L); duplicate lanes once so the same spectrum
        # multiplies both the "head" and "conjugate tail" halves of the folded weights.
        acc = acc_ref[...].reshape(b_loc, ci, 1, L)
        acc2 = jnp.concatenate([acc, acc], axis=-1)          # (b_loc, ci, 1, 2L)
        w = wbig2_ref[...]                                   # (ci, co, 2L) f32
        # Vectorized in-channel contraction: every step is a full (b_loc, co, 2L) slab
        # FMA on the VPU -- no single-sublane slices or per-row concatenates, and no
        # materialized (b, ci, co, 2L) broadcast.
        z = acc2[:, 0] * w[0][None]
        for i in range(1, ci):
            z = z + acc2[:, i] * w[i][None]
        z_ref[...] = z.reshape(b_loc * co, 2 * L).astype(z_ref.dtype)


# ---------------------------------------------------------------------------
# Kernel 2: inverse VFT (real part), tiled over output points.
# The 2/num_pts scale is folded into vinv; z stays f32, vinv streams bf16.
# ---------------------------------------------------------------------------
def _inverse_kernel(z_ref, vinv_ref, o_ref):
    o_ref[...] = jnp.dot(z_ref[...], vinv_ref[...].astype(jnp.float32),
                         preferred_element_type=jnp.float32)


# ---------------------------------------------------------------------------
# One-time precompute of lane-dense operators (depends only on positions and weights,
# so in a real model it is built once and reused every call).
# ---------------------------------------------------------------------------
def precompute_dse_operators(vre, vim, w_im, modes1):
    m = modes1
    mm = m * m
    K = 2 * mm                          # length of the flattened out_ft "head"
    L = 4 * mm                          # forward operator width: [im_top|im_bot|re_top|re_bot]
    M, P = vre.shape
    ci, co = w_im.shape[0], w_im.shape[1]
    assert M == 2 * m * (2 * m - 1)
    assert co >= 2, "module writes out-channels 0 and 1 explicitly"

    # flattened (2m, 2m-1) mode grid, kx-major
    r = np.arange(m)
    c = np.arange(m)
    idx_top = (r[:, None] * (2 * m - 1) + c[None, :]).reshape(-1)        # kx = 0..m-1
    idx_bot = ((r[:, None] + m) * (2 * m - 1) + c[None, :]).reshape(-1)  # kx = -m..-1

    # forward operator: only the 2*m*m modes the mixing consumes.  Zeroing row 0 of the
    # top block implements x_ft[:, 0, :] = 0.
    vim_top = vim[idx_top].at[0].set(0.0)
    vre_top = vre[idx_top].at[0].set(0.0)
    vfwd = jnp.concatenate([vim_top, vim[idx_bot], vre_top, vre[idx_bot]], axis=0)  # (L, P)

    # inverse operator: head rows + conjugate-tail rows (the flip(-1) mode reversal is
    # folded in here; the flip(-2) channel reversal is folded into wbig2 below).
    k_idx = np.arange(K)
    src = np.where(k_idx >= 2 * m, 2 * K - 1 - k_idx, 0)
    mask = jnp.asarray((k_idx >= 2 * m)[:, None], jnp.float32)
    vinv = jnp.concatenate(
        [vre[:K], vim[:K], mask * vre[src], -(mask * vim[src])], axis=0)            # (2L, P)

    # Point axis is padded only to the lane width; tiles are chosen per call as divisors
    # of p_pad, so padding waste never exceeds 127 points.
    p_pad = _ceil_to(P, 128)
    vfwd_t = jnp.pad(vfwd.T, ((0, p_pad - P), (0, 0))).astype(jnp.bfloat16)          # (p_pad, L)
    # Fold the 2/num_pts output scale into the inverse operator (saves a VPU pass/step).
    vinv_p = jnp.pad(vinv * (2.0 / P), ((0, 0), (0, p_pad - P))).astype(jnp.bfloat16)  # (2L, p_pad)

    # spectral weights with -1j and the +/-W out-channel rules folded in:
    #   lanes [0, K)  =  [W | s_o*W]   (pairs with x_ft.imag  -> head_re)
    #   lanes [K, 2K) = -[W | s_o*W]   (pairs with x_ft.real  -> head_im)
    # with s_0 = -1, s_1 = +1, s_{o>=2} = 0 (bottom block only feeds out-channels 0, 1).
    wflat = w_im.reshape(ci, co, mm).astype(jnp.float32)
    sgn = jnp.zeros((co,), jnp.float32).at[0].set(-1.0).at[1].set(1.0)
    w2 = jnp.concatenate([wflat, wflat * sgn[None, :, None]], axis=-1)               # (ci, co, 2mm)
    wbig = jnp.concatenate([w2, -w2], axis=-1)                                       # (ci, co, L)
    # conjugate tail uses the out-channel-reversed head (module's flip(-2)) -> pre-fold it.
    wbig2 = jnp.concatenate([wbig, wbig[:, ::-1, :]], axis=-1)                       # (ci, co, 2L)

    return dict(vfwd=vfwd_t, vinv=vinv_p, wbig2=wbig2,
                modes1=m, num_pts=P, p_pad=p_pad)


# ---------------------------------------------------------------------------
# SpectralConv2d_dse forward (two fused Pallas calls, tiny pad glue only)
# ---------------------------------------------------------------------------
def spectral_conv2d_dse(x, ops):
    vfwd, vinv, wbig2 = ops["vfwd"], ops["vinv"], ops["wbig2"]
    m, p, p_pad = ops["modes1"], ops["num_pts"], ops["p_pad"]
    b, ci, p_in = x.shape
    assert p_in == p
    co = wbig2.shape[1]
    mm = m * m
    L = 4 * mm
    n_in, n_out = b * ci, b * co

    # kernel-1 batch-group split (megacore on v7x): only when per-group row blocks stay
    # sublane-aligned (multiples of 8); otherwise keep a single group (still correct).
    nb = 2 if (b % 2 == 0 and (n_in // 2) % 8 == 0 and (n_out // 2) % 8 == 0) else 1
    n_in_loc, n_out_loc, b_loc = n_in // nb, n_out // nb, b // nb

    # device-derived point-tile size and scoped-VMEM limit (v5e 128 MiB, v6e 128 MiB,
    # v7x 64 MiB physical -- the default scoped limits differ even more).
    vmem_phys = _device_vmem_bytes()
    vmem_limit = int(max(min(vmem_phys - (8 << 20), int(vmem_phys * 0.75)), 16 << 20))
    budget = int(vmem_limit * 0.85)
    # resident bytes (do not scale with p_tile) and per-point bytes (double-buffered streams)
    res1 = n_in_loc * L * 4 + 2 * int(wbig2.size) * 4 + 2 * n_out_loc * 2 * L * 4
    per1 = 2 * (n_in_loc * 2 + L * 2)                 # x tile (bf16) + vfwd tile (bf16)
    res2 = 2 * n_out * 2 * L * 4                      # z resident
    per2 = 2 * (2 * L * 2 + n_out * 4)                # vinv tile (bf16) + out tile (f32)
    p_tile_max = (budget - max(res1, res2)) // max(per1, per2)
    p_tile_max = int(max(128, min(p_tile_max, 8192)))
    q = p_pad // 128
    d_best = 1
    for dd in range(1, q + 1):                        # largest 128-multiple divisor of p_pad
        if q % dd == 0 and 128 * dd <= p_tile_max:
            d_best = dd
    p_tile = 128 * d_best
    n_p = p_pad // p_tile

    cparams1 = pltpu.CompilerParams(dimension_semantics=("parallel", "arbitrary"),
                                    vmem_limit_bytes=vmem_limit)
    cparams2 = pltpu.CompilerParams(dimension_semantics=("parallel",),
                                    vmem_limit_bytes=vmem_limit)

    x2d = x.reshape(n_in, p).astype(jnp.bfloat16)
    if p_pad != p:
        x2d = jnp.pad(x2d, ((0, 0), (0, p_pad - p)))

    # kernel 1: forward VFT (point-axis reduction in VMEM) + spectral mixing, fused
    z = pl.pallas_call(
        functools.partial(_fwd_mix_kernel, b_loc=b_loc, ci=ci, co=co, mm=mm),
        grid=(nb, n_p),
        in_specs=[
            pl.BlockSpec((n_in_loc, p_tile), lambda g, k: (g, k)),
            pl.BlockSpec((p_tile, L), lambda g, k: (k, 0)),
            pl.BlockSpec((ci, co, 2 * L), lambda g, k: (0, 0, 0)),
        ],
        out_specs=pl.BlockSpec((n_out_loc, 2 * L), lambda g, k: (g, 0)),
        out_shape=jax.ShapeDtypeStruct((n_out, 2 * L), jnp.float32),   # z kept in f32
        scratch_shapes=[pltpu.VMEM((n_in_loc, L), jnp.float32)],
        compiler_params=cparams1,
    )(x2d, vfwd, wbig2)

    # kernel 2: inverse VFT, tiled over output points ('parallel' -> megacore)
    out_pad = pl.pallas_call(
        _inverse_kernel,
        grid=(n_p,),
        in_specs=[
            pl.BlockSpec((n_out, 2 * L), lambda j: (0, 0)),
            pl.BlockSpec((2 * L, p_tile), lambda j: (0, j)),
        ],
        out_specs=pl.BlockSpec((n_out, p_tile), lambda j: (0, j)),
        out_shape=jax.ShapeDtypeStruct((n_out, p_pad), jnp.float32),
        compiler_params=cparams2,
    )(z, vinv)

    out = out_pad.reshape(b, co, p_pad)     # metadata-only reshape
    if p_pad != p:
        out = out[:, :, :p]                 # only copies when P isn't already lane-padded
    return out


# ---------------------------------------------------------------------------
# Transformer (VFT) matrices and a pure-JAX complex reference for validation
# ---------------------------------------------------------------------------
def make_vft_matrices(pos_x, pos_y, modes1):
    m = modes1
    kx = jnp.concatenate([jnp.arange(m), jnp.arange(-m, 0)]).astype(jnp.float32)        # (2m,)
    ky = jnp.concatenate([jnp.arange(m), jnp.arange(-(m - 1), 0)]).astype(jnp.float32)  # (2m-1,)
    kx_flat = jnp.repeat(kx, 2 * m - 1)      # kx-major ordering -> reshape (2m, 2m-1)
    ky_flat = jnp.tile(ky, 2 * m)
    phase = kx_flat[:, None] * pos_x[None, :] + ky_flat[:, None] * pos_y[None, :]  # (M, P)
    vre = jnp.cos(phase)
    vim = -jnp.sin(phase)                    # V = exp(-i * phase)
    return vre.astype(jnp.float32), vim.astype(jnp.float32)


def reference_spectral_conv(x, vre, vim, w_im, modes1):
    m = modes1
    b, ci, p = x.shape
    co = w_im.shape[1]
    hi = jax.lax.Precision.HIGHEST
    V = (vre + 1j * vim).astype(jnp.complex64)               # (M, P)

    xp = jnp.transpose(x, (0, 2, 1)).astype(jnp.complex64)   # (B, P, Ci)
    x_ft = jnp.einsum('kp,bpc->bkc', V, xp, precision=hi)    # transformer.forward
    x_ft = x_ft.at[:, 0, :].set(0.0)
    x_ft = jnp.transpose(x_ft, (0, 2, 1)).reshape(b, ci, 2 * m, 2 * m - 1)
    w = w_im.astype(jnp.complex64)

    def cm2d(a, wgt):
        return jnp.einsum('bixy,ioxy->boxy', a, wgt, precision=hi)

    out_ft = jnp.zeros((b, co, 2 * m, m), jnp.complex64)
    out_ft = out_ft.at[:, :, :m, :m].set(-1j * cm2d(x_ft[:, :, :m, :m], w))
    bot = x_ft[:, :, -m:, :m]
    out_ft = out_ft.at[:, 0, -m:, :m].set((-1j * cm2d(bot, -w))[:, 0])
    out_ft = out_ft.at[:, 1, -m:, :m].set((-1j * cm2d(bot, w))[:, 1])

    xf = out_ft.reshape(b, co, 2 * m * m)
    xf2 = jnp.conj(xf[:, :, 2 * m:][:, ::-1, ::-1])           # flip(-1, -2).conj()
    xf = jnp.concatenate([xf, xf2], axis=-1)                  # (B, Co, M)
    xf = jnp.transpose(xf, (0, 2, 1))                         # (B, M, Co)
    vinv = jnp.conj(V).T                                      # transformer.inverse
    out = jnp.einsum('pk,bkc->bpc', vinv, xf, precision=hi)
    out = jnp.transpose(out, (0, 2, 1)) / p * 2
    return jnp.real(out)


if __name__ == "__main__":
    B, Ci, Co = 2, 4, 4
    modes1 = 4               # module uses modes1 == modes2 in its forward slicing
    P = 64                   # number of scattered points

    key = jax.random.PRNGKey(0)
    k_x, k_px, k_py, k_w = jax.random.split(key, 4)
    x = jax.random.normal(k_x, (B, Ci, P), dtype=jnp.float32)
    pos_x = jax.random.uniform(k_px, (P,), dtype=jnp.float32, minval=0.0, maxval=2.0 * np.pi)
    pos_y = jax.random.uniform(k_py, (P,), dtype=jnp.float32, minval=0.0, maxval=2.0 * np.pi)

    # weights1 = scale * torch.rand(Ci, Co, m1, m2, dtype=cfloat); forward only uses .imag
    scale = 1.0 / (Ci * Co)
    w_im = scale * jax.random.uniform(k_w, (Ci, Co, modes1, modes1), dtype=jnp.float32)

    vre, vim = make_vft_matrices(pos_x, pos_y, modes1)
    ops = precompute_dse_operators(vre, vim, w_im, modes1)

    out = jax.block_until_ready(spectral_conv2d_dse(x, ops))
    ref = jax.block_until_ready(reference_spectral_conv(x, vre, vim, w_im, modes1))

    err = float(jnp.max(jnp.abs(out - ref)))
    denom = float(jnp.max(jnp.abs(ref))) + 1e-6
    assert out.shape == (B, Co, P) and out.dtype == jnp.float32
    # x and V stream in bf16 (f32 accumulation, f32 z), so allow ~1% relative error
    assert err / denom < 2e-2, f"kernel/reference mismatch: max_err={err}, scale={denom}"
    print("KERNEL_OK")
</pallas_src>

<mosaic_0001>
module attributes {stable_mosaic.version = 11 : i64} {
  func.func @_fwd_mix_kernel(%arg0: i32, %arg1: i32, %arg2: memref<8x128xbf16, #tpu.memory_space<vmem>>, %arg3: memref<128x64xbf16, #tpu.memory_space<vmem>>, %arg4: memref<4x4x128xf32, #tpu.memory_space<vmem>>, %arg5: memref<8x128xf32, #tpu.memory_space<vmem>>, %arg6: memref<8x64xf32, #tpu.memory_space<vmem>>) attributes {dimension_semantics = [#tpu.dimension_semantics<parallel>, #tpu.dimension_semantics<arbitrary>], iteration_bounds = array<i64: 1, 1>, scalar_prefetch = 0 : i64, scratch_operands = 1 : i64, tpu.core_type = #tpu.core_type<tc>, window_params = [{transform_indices = @transform_0, window_bounds = array<i64: 8, 128>}, {transform_indices = @transform_1, window_bounds = array<i64: 128, 64>}, {pipeline_mode = #tpu.pipeline_mode<synchronous>, transform_indices = @transform_2, window_bounds = array<i64: 4, 4, 128>}, {transform_indices = @transform_3, window_bounds = array<i64: 8, 128>}]} {
    %c0_i32 = arith.constant 0 : i32
    %0 = arith.cmpi eq, %arg1, %c0_i32 : i32
    %1 = arith.extui %0 : i1 to i32
    %c0_i32_0 = arith.constant 0 : i32
    %2 = arith.cmpi ne, %1, %c0_i32_0 : i32
    scf.if %2 {
      %cst_10 = arith.constant 0.000000e+00 : f32
      %12 = vector.broadcast %cst_10 : f32 to vector<8x64xf32>
      %c0_11 = arith.constant 0 : index
      %c0_12 = arith.constant 0 : index
      %13 = vector.load %arg6[%c0_11, %c0_12] : memref<8x64xf32, #tpu.memory_space<vmem>>, vector<8x64xf32>
      tpu.vector_store %arg6[%c0_11, %c0_12], %12 {strides = array<i32>} : memref<8x64xf32, #tpu.memory_space<vmem>>, vector<8x64xf32>,
    } else {
    }
    %c0 = arith.constant 0 : index
    %c0_1 = arith.constant 0 : index
    %3 = vector.load %arg6[%c0, %c0_1] : memref<8x64xf32, #tpu.memory_space<vmem>>, vector<8x64xf32>
    %c0_2 = arith.constant 0 : index
    %c0_3 = arith.constant 0 : index
    %4 = vector.load %arg2[%c0_2, %c0_3] : memref<8x128xbf16, #tpu.memory_space<vmem>>, vector<8x128xbf16>
    %c0_4 = arith.constant 0 : index
    %c0_5 = arith.constant 0 : index
    %5 = vector.load %arg3[%c0_4, %c0_5] : memref<128x64xbf16, #tpu.memory_space<vmem>>, vector<128x64xbf16>
    %cst = arith.constant dense<0.000000e+00> : vector<8x64xf32>
    %6 = tpu.matmul %4, %5, %cst {dimension_numbers = #tpu.dot_dimension_numbers<[1], [0], [0], [1], [0, 0, 1, 1], [], []>} : vector<8x128xbf16>, vector<128x64xbf16>, vector<8x64xf32> -> vector<8x64xf32>
    %7 = arith.addf %3, %6 : vector<8x64xf32>
    %c0_6 = arith.constant 0 : index
    %c0_7 = arith.constant 0 : index
    %8 = vector.load %arg6[%c0_6, %c0_7] : memref<8x64xf32, #tpu.memory_space<vmem>>, vector<8x64xf32>
    tpu.vector_store %arg6[%c0_6, %c0_7], %7 {strides = array<i32>} : memref<8x64xf32, #tpu.memory_space<vmem>>, vector<8x64xf32>,
    %c0_i32_8 = arith.constant 0 : i32
    %9 = arith.cmpi eq, %arg1, %c0_i32_8 : i32
    %10 = arith.extui %9 : i1 to i32
    %c0_i32_9 = arith.constant 0 : i32
    %11 = arith.cmpi ne, %10, %c0_i32_9 : i32
    scf.if %11 {
      %c0_10 = arith.constant 0 : index
      %c0_11 = arith.constant 0 : index
      %12 = vector.load %arg6[%c0_10, %c0_11] : memref<8x64xf32, #tpu.memory_space<vmem>>, vector<8x64xf32>
      %13 = vector.shape_cast %12 : vector<8x64xf32> to vector<2x4x1x64xf32>
      %14 = tpu.concatenate %13, %13 in 3 : vector<2x4x1x64xf32>, vector<2x4x1x64xf32> -> vector<2x4x1x128xf32>
      %c0_12 = arith.constant 0 : index
      %c0_13 = arith.constant 0 : index
      %c0_14 = arith.constant 0 : index
      %15 = vector.load %arg4[%c0_12, %c0_13, %c0_14] : memref<4x4x128xf32, #tpu.memory_space<vmem>>, vector<4x4x128xf32>
      %16 = vector.extract_strided_slice %14 {offsets = [0, 0, 0, 0], sizes = [2, 1, 1, 128], strides = [1, 1, 1, 1]} : vector<2x4x1x128xf32> to vector<2x1x1x128xf32>
      %17 = vector.shape_cast %16 : vector<2x1x1x128xf32> to vector<2x1x128xf32>
      %18 = vector.extract_strided_slice %15 {offsets = [0, 0, 0], sizes = [1, 4, 128], strides = [1, 1, 1]} : vector<4x4x128xf32> to vector<1x4x128xf32>
      %19 = vector.shape_cast %18 : vector<1x4x128xf32> to vector<4x128xf32>
      %20 = vector.shape_cast %19 : vector<4x128xf32> to vector<1x4x128xf32>
      %21 = vector.broadcast %17 : vector<2x1x128xf32> to vector<2x4x128xf32>
      %22 = vector.broadcast %20 : vector<1x4x128xf32> to vector<2x4x128xf32>
      %23 = arith.mulf %21, %22 : vector<2x4x128xf32>
      %24 = vector.extract_strided_slice %14 {offsets = [0, 1, 0, 0], sizes = [2, 1, 1, 128], strides = [1, 1, 1, 1]} : vector<2x4x1x128xf32> to vector<2x1x1x128xf32>
      %25 = vector.shape_cast %24 : vector<2x1x1x128xf32> to vector<2x1x128xf32>
      %26 = vector.extract_strided_slice %15 {offsets = [1, 0, 0], sizes = [1, 4, 128], strides = [1, 1, 1]} : vector<4x4x128xf32> to vector<1x4x128xf32>
      %27 = vector.shape_cast %26 : vector<1x4x128xf32> to vector<4x128xf32>
      %28 = vector.shape_cast %27 : vector<4x128xf32> to vector<1x4x128xf32>
      %29 = vector.broadcast %25 : vector<2x1x128xf32> to vector<2x4x128xf32>
      %30 = vector.broadcast %28 : vector<1x4x128xf32> to vector<2x4x128xf32>
      %31 = arith.mulf %29, %30 : vector<2x4x128xf32>
      %32 = arith.addf %23, %31 : vector<2x4x128xf32>
      %33 = vector.extract_strided_slice %14 {offsets = [0, 2, 0, 0], sizes = [2, 1, 1, 128], strides = [1, 1, 1, 1]} : vector<2x4x1x128xf32> to vector<2x1x1x128xf32>
      %34 = vector.shape_cast %33 : vector<2x1x1x128xf32> to vector<2x1x128xf32>
      %35 = vector.extract_strided_slice %15 {offsets = [2, 0, 0], sizes = [1, 4, 128], strides = [1, 1, 1]} : vector<4x4x128xf32> to vector<1x4x128xf32>
      %36 = vector.shape_cast %35 : vector<1x4x128xf32> to vector<4x128xf32>
      %37 = vector.shape_cast %36 : vector<4x128xf32> to vector<1x4x128xf32>
      %38 = vector.broadcast %34 : vector<2x1x128xf32> to vector<2x4x128xf32>
      %39 = vector.broadcast %37 : vector<1x4x128xf32> to vector<2x4x128xf32>
      %40 = arith.mulf %38, %39 : vector<2x4x128xf32>
      %41 = arith.addf %32, %40 : vector<2x4x128xf32>
      %42 = vector.extract_strided_slice %14 {offsets = [0, 3, 0, 0], sizes = [2, 1, 1, 128], strides = [1, 1, 1, 1]} : vector<2x4x1x128xf32> to vector<2x1x1x128xf32>
      %43 = vector.shape_cast %42 : vector<2x1x1x128xf32> to vector<2x1x128xf32>
      %44 = vector.extract_strided_slice %15 {offsets = [3, 0, 0], sizes = [1, 4, 128], strides = [1, 1, 1]} : vector<4x4x128xf32> to vector<1x4x128xf32>
      %45 = vector.shape_cast %44 : vector<1x4x128xf32> to vector<4x128xf32>
      %46 = vector.shape_cast %45 : vector<4x128xf32> to vector<1x4x128xf32>
      %47 = vector.broadcast %43 : vector<2x1x128xf32> to vector<2x4x128xf32>
      %48 = vector.broadcast %46 : vector<1x4x128xf32> to vector<2x4x128xf32>
      %49 = arith.mulf %47, %48 : vector<2x4x128xf32>
      %50 = arith.addf %41, %49 : vector<2x4x128xf32>
      %51 = vector.shape_cast %50 : vector<2x4x128xf32> to vector<8x128xf32>
      %c0_15 = arith.constant 0 : index
      %c0_16 = arith.constant 0 : index
      %52 = vector.load %arg5[%c0_15, %c0_16] : memref<8x128xf32, #tpu.memory_space<vmem>>, vector<8x128xf32>
      tpu.vector_store %arg5[%c0_15, %c0_16], %51 {strides = array<i32>} : memref<8x128xf32, #tpu.memory_space<vmem>>, vector<8x128xf32>,
    } else {
    }
    return
  }
  func.func @transform_0(%arg0: i32, %arg1: i32) -> (i32, i32) {
    %c0_i32 = arith.constant 0 : i32
    return %arg0, %arg1 : i32, i32
  }
  func.func @transform_1(%arg0: i32, %arg1: i32) -> (i32, i32) {
    %c0_i32 = arith.constant 0 : i32
    %c0_i32_0 = arith.constant 0 : i32
    return %arg1, %c0_i32 : i32, i32
  }
  func.func @transform_2(%arg0: i32, %arg1: i32) -> (i32, i32, i32) {
    %c0_i32 = arith.constant 0 : i32
    %c0_i32_0 = arith.constant 0 : i32
    %c0_i32_1 = arith.constant 0 : i32
    %c0_i32_2 = arith.constant 0 : i32
    return %c0_i32, %c0_i32_0, %c0_i32_1 : i32, i32, i32
  }
  func.func @transform_3(%arg0: i32, %arg1: i32) -> (i32, i32) {
    %c0_i32 = arith.constant 0 : i32
    %c0_i32_0 = arith.constant 0 : i32
    return %arg0, %c0_i32 : i32, i32
  }
}

</mosaic_0001>

<llo_original>
// kernel: tpu_custom_call.1
$region0: #{tpu_custom_call.1}
  #allocation0 [shape = 'u32[]', space=smem, size = 0x4, offset = 0x4, fixed_abs, tag = 'smem constant byte address 0x4 - core index']
  #allocation1 [shape = 'u32[144,128]{1,0:T(1,128)}', space=vmem, size = 0x12000, scoped, tag = 'internal scratch']
  #allocation2 [shape = 'f32[8,64]{1,0:T(8,128)}', space=vmem, size = 0x1000, scoped, tag = 'scratch operand']
  %s0 = inlined_call_operand.vmem [shape: bf16[8,128], index: 0, kind: input, shape index: {}]
  %s1 = inlined_call_operand.vmem [shape: bf16[128,64], index: 1, kind: input, shape index: {}]
  %s2 = inlined_call_operand.vmem [shape: f32[4,4,128], index: 2, kind: input, shape index: {}]
  %s3 = inlined_call_operand.hbm [shape: f32[8,128], index: 3, kind: output, shape index: {}]
  %s4 = sld [smem:[#allocation0]]
  $region30: #{tpu_custom_call.1} parent=0
    _
  %s6 = ssub.s32 1, %s4
  %s7 = scalar_select 0, %s6, %s4
  $region1: #{tpu_custom_call.1} parent=0
    #allocation3 [shape = 'u8[4096]{0}', space=vmem, size = 0x1000, scoped, tag = 'output window, operand 0, single buffered']
    #allocation4 [shape = 's32[1]{0}', space=sflag, size = 0x4, scoped, tag = 'scoped memory for tpu_custom_call.1']
    %8 = vsyncpa [#allocation4], 0
    // Predicated region
    $region2: #{tpu_custom_call.1} parent=1 // pred_check
      _
    $region3: #{tpu_custom_call.1} parent=1 // pred_check_branch
      %10 = sbr.rel (0) target = $region5
    $region4: #{tpu_custom_call.1} parent=1 // pred_region
      _
    $region5: #{tpu_custom_call.1} parent=1 // pred_fallthru
      _
    // Predicated region
    $region6: #{tpu_custom_call.1} parent=1 // pred_check
      _
    $region7: #{tpu_custom_call.1} parent=1 // pred_check_branch
      %12 = sbr.rel (0) target = $region9
    $region8: #{tpu_custom_call.1} parent=1 // pred_region
      _
    $region9: #{tpu_custom_call.1} parent=1 // pred_fallthru
      _
    // Predicated region
    $region10: #{tpu_custom_call.1} parent=1 // pred_check
      _
    $region11: #{tpu_custom_call.1} parent=1 // pred_check_branch
      %14 = sbr.rel (0) target = $region13
    $region12: #{tpu_custom_call.1} parent=1 // pred_region
      _
    $region13: #{tpu_custom_call.1} parent=1 // pred_fallthru
      _
    %p16 = scmp.eq.s32.totalorder 0, 0
    // Predicated region
    $region14: #{tpu_custom_call.1} parent=1 // pred_check
      %p17 = pneg %p16
    $region15: #{tpu_custom_call.1} parent=1 // pred_check_branch
      %19 = sbr.rel (%p17) target = $region17
    $region16: #{tpu_custom_call.1} parent=1 // pred_region
      %vm20 = vcmask 523264
      %21 = vst.msk [vmem:[#allocation2] sm:$0xff] %vm20, 0.0
    $region17: #{tpu_custom_call.1} parent=1 // pred_fallthru
      _
    %v22 = vld [vmem:[#allocation2] sm:$0xff]
    %v23 = vld [vmem:[%s0] sm:$0xf]
    %v24 = vld [vmem:[%s1] sm:$0xf]
    %v25 = vld [vmem:[%s1 + $0x4] sm:$0xf]
    %v26 = vld [vmem:[%s1 + $0x8] sm:$0xf]
    %v27 = vld [vmem:[%s1 + $0xc] sm:$0xf]
    %v28 = vld [vmem:[%s1 + $0x10] sm:$0xf]
    %v29 = vld [vmem:[%s1 + $0x14] sm:$0xf]
    %v30 = vld [vmem:[%s1 + $0x18] sm:$0xf]
    %v31 = vld [vmem:[%s1 + $0x1c] sm:$0xf]
    %v32 = vld [vmem:[%s1 + $0x20] sm:$0xf]
    %v33 = vld [vmem:[%s1 + $0x24] sm:$0xf]
    %v34 = vld [vmem:[%s1 + $0x28] sm:$0xf]
    %v35 = vld [vmem:[%s1 + $0x2c] sm:$0xf]
    %v36 = vld [vmem:[%s1 + $0x30] sm:$0xf]
    %v37 = vld [vmem:[%s1 + $0x34] sm:$0xf]
    %v38 = vld [vmem:[%s1 + $0x38] sm:$0xf]
    %v39 = vld [vmem:[%s1 + $0x3c] sm:$0xf]
    %v56 = vunpack.c.l.b16 %v24
    %v57 = vunpack.c.l.b16 %v25
    %v58 = vunpack.c.l.b16 %v26
    %v59 = vunpack.c.l.b16 %v27
    %v60 = vunpack.c.l.b16 %v28
    %v61 = vunpack.c.l.b16 %v29
    %v62 = vunpack.c.l.b16 %v30
    %v63 = vunpack.c.l.b16 %v31
    %v64 = vunpack.c.l.b16 %v32
    %v65 = vunpack.c.l.b16 %v33
    %v66 = vunpack.c.l.b16 %v34
    %v67 = vunpack.c.l.b16 %v35
    %v68 = vunpack.c.l.b16 %v36
    %v69 = vunpack.c.l.b16 %v37
    %v70 = vunpack.c.l.b16 %v38
    %v71 = vunpack.c.l.b16 %v39
    %v72 = vpack.c.b16 %v57, %v56
    %v73 = vpack.c.b16 %v59, %v58
    %v74 = vpack.c.b16 %v61, %v60
    %v75 = vpack.c.b16 %v63, %v62
    %v76 = vpack.c.b16 %v65, %v64
    %v77 = vpack.c.b16 %v67, %v66
    %v78 = vpack.c.b16 %v69, %v68
    %v79 = vpack.c.b16 %v71, %v70
    %88 = vmatprep.subr.bf16.mxu0 0
    %89 = vmatpush1.bf16.msra.mxu0 %v72
    %90 = vmatprep.subr.bf16.mxu0 0
    %91 = vmatpush1.bf16.msra.mxu0 %v73
    %92 = vmatprep.subr.bf16.mxu0 0
    %93 = vmatpush1.bf16.msra.mxu0 %v74
    %94 = vmatprep.subr.bf16.mxu0 0
    %95 = vmatpush1.bf16.msra.mxu0 %v75
    %96 = vmatprep.subr.bf16.mxu0 0
    %97 = vmatpush1.bf16.msra.mxu0 %v76
    %98 = vmatprep.subr.bf16.mxu0 0
    %99 = vmatpush1.bf16.msra.mxu0 %v77
    %100 = vmatprep.subr.bf16.mxu0 0
    %101 = vmatpush1.bf16.msra.mxu0 %v78
    %102 = vmatprep.subr.bf16.mxu0 0
    %103 = vmatpush1.bf16.msra.mxu0 %v79
    %104 = vmatprep.subr.bf16.mxu0 0
    %105 = vmatpush1.bf16.msra.mxu0 0
    %106 = vmatprep.subr.bf16.mxu0 0
    %107 = vmatpush1.bf16.msra.mxu0 0
    %108 = vmatprep.subr.bf16.mxu0 0
    %109 = vmatpush1.bf16.msra.mxu0 0
    %110 = vmatprep.subr.bf16.mxu0 0
    %111 = vmatpush1.bf16.msra.mxu0 0
    %112 = vmatprep.subr.bf16.mxu0 0
    %113 = vmatpush1.bf16.msra.mxu0 0
    %114 = vmatprep.subr.bf16.mxu0 0
    %115 = vmatpush1.bf16.msra.mxu0 0
    %116 = vmatprep.subr.bf16.mxu0 0
    %117 = vmatpush1.bf16.msra.mxu0 0
    %118 = vmatprep.subr.bf16.mxu0 0
    %119 = vmatpush1.bf16.msra.mxu0 0
    %120 = vmatprep.mubr.bf16.mxu0 0
    %121 = vmatmul.mubr.bf16.gmra.mrb[0].mxu0 %v23
    %v122 = vpop.f32.mrb[0].mxu0
    %v123 = vadd.f32 0.0, %v122
    %v124 = vpop.f32.mrb[0].mxu0
    %v125 = vpop.f32.mrb[0].mxu0
    %v126 = vpop.f32.mrb[0].mxu0
    %127 = vdwg.mxu0
    %v128 = vadd.f32 %v22, %v123
    %vm129 = vcmask 523264
    %130 = vst.msk [vmem:[#allocation2] sm:$0xff] %vm129, %v128
    // Predicated region
    $region18: #{tpu_custom_call.1} parent=1 // pred_check
      %p131 = pneg %p16
    $region19: #{tpu_custom_call.1} parent=1 // pred_check_branch
      %133 = sbr.rel (%p131) target = $region21
    $region20: #{tpu_custom_call.1} parent=1 // pred_region
      %v134 = vld [vmem:[#allocation2] sm:$0xff]
      %v136 = vcombine.high %v134, %v134
      %v138 = vunpack.c.l.s4 1966171168
      %v139 = vunpack.c.0.s8 %v138
      %v140 = vlaneseq
      %v141 = vshrl.u32 %v140, 7
      %v142 = vsub.s32 %v139, %v141
      %v143 = vrot.slane %v134, %v142
      %v145 = vunpack.c.l.s4 1966171168
      %v146 = vunpack.c.0.s8 %v145
      %v147 = vlaneseq
      %v148 = vshrl.u32 %v147, 7
      %v149 = vsub.s32 %v146, %v148
      %v150 = vrot.slane %v136, %v149
      %v151 = vcombine.high %v143, %v143
      %v152 = vcombine.high %v150, %v150
      %v154 = vunpack.c.l.s4 1966171168
      %v155 = vunpack.c.0.s8 %v154
      %v156 = vlaneseq
      %v157 = vshrl.u32 %v156, 7
      %v158 = vsub.s32 %v155, %v157
      %v159 = vrot.slane %v143, %v158
      %v161 = vunpack.c.l.s4 1966171168
      %v162 = vunpack.c.0.s8 %v161
      %v163 = vlaneseq
      %v164 = vshrl.u32 %v163, 7
      %v165 = vsub.s32 %v162, %v164
      %v166 = vrot.slane %v150, %v165
      %v168 = vunpack.c.l.s4 1966171168
      %v169 = vunpack.c.0.s8 %v168
      %v170 = vlaneseq
      %v171 = vshrl.u32 %v170, 7
      %v172 = vsub.s32 %v169, %v171
      %v173 = vrot.slane %v151, %v172
      %v175 = vunpack.c.l.s4 1966171168
      %v176 = vunpack.c.0.s8 %v175
      %v177 = vlaneseq
      %v178 = vshrl.u32 %v177, 7
      %v179 = vsub.s32 %v176, %v178
      %v180 = vrot.slane %v152, %v179
      %v181 = vcombine.high %v159, %v159
      %v182 = vcombine.high %v166, %v166
      %v183 = vcombine.high %v173, %v173
      %v184 = vcombine.high %v180, %v180
      %v193 = vlaneseq
      %v194 = vshrl.u32 %v193, 7
      %v195 = vsub.s32 0, %v194
      %v196 = vrot.slane %v159, %v195
      %v197 = vlaneseq
      %v198 = vshrl.u32 %v197, 7
      %v199 = vsub.s32 0, %v198
      %v200 = vrot.slane %v173, %v199
      %v201 = vlaneseq
      %v202 = vshrl.u32 %v201, 7
      %v203 = vsub.s32 0, %v202
      %v204 = vrot.slane %v181, %v203
      %v205 = vlaneseq
      %v206 = vshrl.u32 %v205, 7
      %v207 = vsub.s32 0, %v206
      %v208 = vrot.slane %v183, %v207
      %v209 = vlaneseq
      %v210 = vshrl.u32 %v209, 7
      %v211 = vsub.s32 0, %v210
      %v212 = vrot.slane %v166, %v211
      %v213 = vlaneseq
      %v214 = vshrl.u32 %v213, 7
      %v215 = vsub.s32 0, %v214
      %v216 = vrot.slane %v180, %v215
      %v217 = vlaneseq
      %v218 = vshrl.u32 %v217, 7
      %v219 = vsub.s32 0, %v218
      %v220 = vrot.slane %v182, %v219
      %v221 = vlaneseq
      %v222 = vshrl.u32 %v221, 7
      %v223 = vsub.s32 0, %v222
      %v224 = vrot.slane %v184, %v223
      %225 = vrot.lane.b32.xlu0 %v196, 64
      %v226 = vpop.permute.xlu0 %225
      %227 = vrot.lane.b32.xlu0 %v200, 64
      %v228 = vpop.permute.xlu0 %227
      %229 = vrot.lane.b32.xlu0 %v204, 64
      %v230 = vpop.permute.xlu0 %229
      %231 = vrot.lane.b32.xlu0 %v208, 64
      %v232 = vpop.permute.xlu0 %231
      %233 = vrot.lane.b32.xlu0 %v212, 64
      %v234 = vpop.permute.xlu0 %233
      %235 = vrot.lane.b32.xlu0 %v216, 64
      %v236 = vpop.permute.xlu0 %235
      %237 = vrot.lane.b32.xlu0 %v220, 64
      %v238 = vpop.permute.xlu0 %237
      %239 = vrot.lane.b32.xlu0 %v224, 64
      %v240 = vpop.permute.xlu0 %239
      %v249 = vsel %vm129, %v159, %v226
      %v250 = vsel %vm129, %v173, %v228
      %v251 = vsel %vm129, %v181, %v230
      %v252 = vsel %vm129, %v183, %v232
      %v253 = vsel %vm129, %v166, %v234
      %v254 = vsel %vm129, %v180, %v236
      %v255 = vsel %vm129, %v182, %v238
      %v256 = vsel %vm129, %v184, %v240
      %v257 = vld [vmem:[%s2] sm:$0xf]
      %v258 = vld [vmem:[%s2 + $0x4] sm:$0xf]
      %v259 = vld [vmem:[%s2 + $0x8] sm:$0xf]
      %v260 = vld [vmem:[%s2 + $0xc] sm:$0xf]
      %v261 = vlaneseq
      %v262 = vshrl.u32 %v261, 7
      %v263 = vsub.s32 0, %v262
      %v264 = vrot.slane %v249, %v263
      %v265 = vlaneseq
      %v266 = vshrl.u32 %v265, 7
      %v267 = vsub.s32 0, %v266
      %v268 = vrot.slane %v253, %v267
      %v269 = vmul.f32 %v264, %v257
      %v270 = vmul.f32 %v268, %v257
      %v271 = vlaneseq
      %v272 = vshrl.u32 %v271, 7
      %v273 = vsub.s32 0, %v272
      %v274 = vrot.slane %v250, %v273
      %v275 = vlaneseq
      %v276 = vshrl.u32 %v275, 7
      %v277 = vsub.s32 0, %v276
      %v278 = vrot.slane %v254, %v277
      %v279 = vmul.f32 %v274, %v258
      %v280 = vmul.f32 %v278, %v258
      %v281 = vadd.f32 %v269, %v279
      %v282 = vadd.f32 %v270, %v280
      %v283 = vlaneseq
      %v284 = vshrl.u32 %v283, 7
      %v285 = vsub.s32 0, %v284
      %v286 = vrot.slane %v251, %v285
      %v287 = vlaneseq
      %v288 = vshrl.u32 %v287, 7
      %v289 = vsub.s32 0, %v288
      %v290 = vrot.slane %v255, %v289
      %v291 = vmul.f32 %v286, %v259
      %v292 = vmul.f32 %v290, %v259
      %v293 = vadd.f32 %v281, %v291
      %v294 = vadd.f32 %v282, %v292
      %v295 = vlaneseq
      %v296 = vshrl.u32 %v295, 7
      %v297 = vsub.s32 0, %v296
      %v298 = vrot.slane %v252, %v297
      %v299 = vlaneseq
      %v300 = vshrl.u32 %v299, 7
      %v301 = vsub.s32 0, %v300
      %v302 = vrot.slane %v256, %v301
      %v303 = vmul.f32 %v298, %v260
      %v304 = vmul.f32 %v302, %v260
      %v305 = vadd.f32 %v293, %v303
      %v306 = vadd.f32 %v294, %v304
      %v309 = vcombine.low %v305, %v306
      %311 = vst [vmem:[#allocation3] sm:$0xff] %v309
    $region21: #{tpu_custom_call.1} parent=1 // pred_fallthru
      _
    // Predicated region
    $region22: #{tpu_custom_call.1} parent=1 // pred_check
      _
    $region23: #{tpu_custom_call.1} parent=1 // pred_check_branch
      %313 = sbr.rel (0) target = $region25
    $region24: #{tpu_custom_call.1} parent=1 // pred_region
      %s315 = ssub.s32 128, 128
      %316 = vsyncadd [#allocation4], %s315
      %s318 = sshll.u32 [#allocation3], 4
      %s319 = int_to_ptr.vmem [resolvable:$true] %s318
      %321 = dma.vmem_to_hbm [thread:$0]  %s319, 128, %s3, [#allocation4]
    $region25: #{tpu_custom_call.1} parent=1 // pred_fallthru
      _
    // Predicated region
    $region26: #{tpu_custom_call.1} parent=1 // pred_check
      _
    $region27: #{tpu_custom_call.1} parent=1 // pred_check_branch
      %323 = sbr.rel (0) target = $region29
    $region28: #{tpu_custom_call.1} parent=1 // pred_region
      %324 = dma.done [#allocation4], 128
    $region29: #{tpu_custom_call.1} parent=1 // pred_fallthru
      _
    %325 = vsyncpa [#allocation4], 1

</llo_original>
